<compile_context>
chip_gen: v7x
topology: tpu7x:2x2x1
jax: 0.10.0
libtpu: 0.0.40
codegen_flags: <defaults>
</compile_context>

<pallas_src>
import jax
import jax.numpy as jnp
from jax.experimental import pallas as pl
from jax.experimental.pallas import tpu as pltpu


def _round_up(x, m):
    return (x + m - 1) // m * m


def _fast_hetero_sgap_kernel(idx_ref, feat_hbm, alpha_ref, w_ref, b_ref,
                             out_ref, xbuf, copy_sems):
    """One batch tile: DMA-gather rows, aggregate over hops/subgraphs, linear head.

    idx_ref   : SMEM [B_pad]            node indices (scalar prefetch)
    feat_hbm  : HBM  [N, S*Fp]          propagated feature table (pl.ANY)
    alpha_ref : VMEM [1, S*Fp]          aggregator weight, broadcast along Fp
    w_ref     : VMEM [Fp, Cp]           padded linear weight
    b_ref     : VMEM [1, Cp]            padded bias
    out_ref   : VMEM [TB, Cp]           one output tile
    xbuf      : VMEM [2, TB, S*Fp]      double-buffered gathered rows
    copy_sems : DMA semaphores [2]      one per buffer slot
    """
    i = pl.program_id(0)            # parallel tile-group (megacore shardable)
    j = pl.program_id(1)            # sequential tile within the group
    nt = pl.num_programs(1)
    tb, _ = out_ref.shape
    k = xbuf.shape[2]               # S * Fp
    fpad = w_ref.shape[0]
    n_hops = k // fpad              # S
    tile = i * nt + j

    def start_gather(t, slot):
        # One contiguous row copy per gathered node (HBM -> VMEM slot).
        @pl.loop(0, tb)
        def _(r):
            row = idx_ref[t * tb + r]
            pltpu.make_async_copy(feat_hbm.at[row], xbuf.at[slot, r],
                                  copy_sems.at[slot]).start()

    # Prime the pipeline at the start of every sequential sweep.
    @pl.when(j == 0)
    def _():
        start_gather(tile, 0)

    # Prefetch the next tile's rows while this tile transfers / computes.
    @pl.when(j + 1 < nt)
    def _():
        start_gather(tile + 1, (j + 1) % 2)

    slot = j % 2

    # Wait for all TB row copies of the current slot (all signal copy_sems[slot]).
    @pl.loop(0, tb)
    def _(r):
        pltpu.make_async_copy(feat_hbm.at[0], xbuf.at[slot, r],
                              copy_sems.at[slot]).wait()

    # Aggregator (FastOneDimConvolution): weighted sum over the S hop/subgraph
    # chunks.  Each chunk is a lane-dense [TB, Fp] tile; alpha is broadcast
    # across the TB rows from a [1, Fp] slice.
    agg = xbuf[slot, :, pl.ds(0, fpad)] * alpha_ref[:, pl.ds(0, fpad)]
    for s in range(1, n_hops):
        agg = agg + (xbuf[slot, :, pl.ds(s * fpad, fpad)]
                     * alpha_ref[:, pl.ds(s * fpad, fpad)])

    # Base model: linear head on the MXU (bias added once per tile).
    out_ref[...] = (
        jnp.dot(agg, w_ref[...], preferred_element_type=jnp.float32)
        + b_ref[...]
    ).astype(out_ref.dtype)


def fast_hetero_sgap_forward(idx, table, alpha_row, w_pad, bias_pad, *,
                             num_classes, batch_tile=128, parallel_groups=2):
    """out = Linear(FastOneDimConv(table[idx])) computed in a Pallas TPU kernel.

    table     : [N, S*Fp]  f32  (HBM resident, row per node)
    alpha_row : [1, S*Fp]  f32  aggregator weights broadcast along Fp
    w_pad     : [Fp, Cp]   f32
    bias_pad  : [1, Cp]    f32
    """
    n, k = table.shape
    fpad, cpad = w_pad.shape
    assert k % fpad == 0
    b = idx.shape[0]

    num_tiles = -(-b // batch_tile)
    p = max(1, min(parallel_groups, num_tiles))
    t = -(-num_tiles // p)
    padded_batch = p * t * batch_tile

    idx = jnp.asarray(idx, jnp.int32)
    idx = jnp.where(idx < 0, idx + n, idx)   # PyTorch-style negative indexing
    idx = jnp.clip(idx, 0, n - 1)            # OOB DMA reads are unchecked -> clamp
    if padded_batch != b:
        idx = jnp.concatenate([idx, jnp.zeros((padded_batch - b,), jnp.int32)])

    out = pl.pallas_call(
        _fast_hetero_sgap_kernel,
        out_shape=jax.ShapeDtypeStruct((padded_batch, cpad), jnp.float32),
        grid_spec=pltpu.PrefetchScalarGridSpec(
            num_scalar_prefetch=1,            # idx -> SMEM
            grid=(p, t),
            in_specs=[
                # Feature table stays in HBM; rows are gathered with manual DMA.
                pl.BlockSpec(memory_space=pl.ANY),
                # Small parameters, VMEM resident (constant block index).
                pl.BlockSpec((1, k), lambda i, j, idx_ref: (0, 0)),
                pl.BlockSpec((fpad, cpad), lambda i, j, idx_ref: (0, 0)),
                pl.BlockSpec((1, cpad), lambda i, j, idx_ref: (0, 0)),
            ],
            out_specs=pl.BlockSpec((batch_tile, cpad),
                                   lambda i, j, idx_ref, t=t: (i * t + j, 0)),
            scratch_shapes=[
                pltpu.VMEM((2, batch_tile, k), jnp.float32),   # gather double-buffer
                pltpu.SemaphoreType.DMA((2,)),                 # one sem per slot
            ],
        ),
        compiler_params=pltpu.CompilerParams(
            dimension_semantics=("parallel", "arbitrary")),
        cost_estimate=pl.CostEstimate(
            flops=2 * padded_batch * k + 2 * padded_batch * fpad * cpad,
            transcendentals=0,
            bytes_accessed=(padded_batch * k + fpad * cpad + cpad
                            + padded_batch * cpad) * 4),
    )(idx, table, alpha_row, w_pad, bias_pad)

    return out[:b, :num_classes]


class FastBaseHeteroSGAPModelPallas:
    """Mirror of FastBaseHeteroSGAPModel with canonical aggregator / base model."""

    def __init__(self, prop_steps, feat_dim, num_subgraphs, num_classes, key):
        self._prop_steps = prop_steps
        self._feat_dim = feat_dim
        self._num_classes = num_classes
        self._num_subgraphs = num_subgraphs
        self._num_hop_sub = num_subgraphs * (prop_steps + 1)   # S
        self._fpad = _round_up(feat_dim, 128)
        self._cpad = _round_up(num_classes, 128)
        self._pre_msg_learnable = False
        self._table = None

        k_w, k_a = jax.random.split(key)
        scale = 1.0 / jnp.sqrt(jnp.float32(feat_dim))
        # Linear "base model" head (SGC / LogisticRegression style).
        self.weight = (jax.random.uniform(k_w, (feat_dim, num_classes),
                                          jnp.float32, -1.0, 1.0) * scale)
        self.bias = jnp.zeros((num_classes,), jnp.float32)
        # FastOneDimConvolution aggregator weight: one scalar per subgraph-hop.
        self.agg_weight = jax.random.uniform(k_a, (self._num_hop_sub,),
                                             jnp.float32, 0.0, 1.0)

        # TPU-friendly (padded / pre-broadcast) parameter layouts, built once.
        self._w_pad = (jnp.zeros((self._fpad, self._cpad), jnp.float32)
                       .at[:feat_dim, :num_classes].set(self.weight))
        self._bias_pad = (jnp.zeros((1, self._cpad), jnp.float32)
                          .at[0, :num_classes].set(self.bias))
        self._alpha_row = jnp.repeat(self.agg_weight, self._fpad).reshape(
            1, self._num_hop_sub * self._fpad)

    def preprocess(self, propagated_feat_list_list):
        """Accepts the propagated feature tensor [N, feat_dim, S] (module layout).

        TODO(synk): the real preprocess runs nars_preprocess + sparse
        _pre_graph_op.propagate over hetero subgraphs; that graph machinery has
        no Pallas equivalent here, so the already-propagated tensor is taken.
        """
        n, f, s = propagated_feat_list_list.shape
        assert f == self._feat_dim and s == self._num_hop_sub
        tbl = jnp.transpose(propagated_feat_list_list, (0, 2, 1))   # [N, S, F]
        if self._fpad != f:
            tbl = jnp.pad(tbl, ((0, 0), (0, 0), (0, self._fpad - f)))
        # Row per node, hop/subgraph chunks concatenated along the lane dim.
        self._table = tbl.reshape(n, s * self._fpad)

    def postprocess(self, adj, output):
        del adj
        return output

    def forward(self, idx):
        assert self._table is not None, "call preprocess() first"
        return fast_hetero_sgap_forward(
            idx, self._table, self._alpha_row, self._w_pad, self._bias_pad,
            num_classes=self._num_classes)

    model_forward = forward


if __name__ == "__main__":
    key = jax.random.PRNGKey(0)
    k_feat, k_idx, k_model = jax.random.split(key, 3)

    num_nodes = 256
    feat_dim = 128
    prop_steps = 3
    num_subgraphs = 2                       # S = 2 * (3 + 1) = 8
    num_classes = 10
    batch = 500                             # deliberately not a tile multiple

    s = num_subgraphs * (prop_steps + 1)
    # Propagated features in the PyTorch module's layout: [N, feat_dim, S].
    table = jax.random.normal(k_feat, (num_nodes, feat_dim, s), jnp.float32)
    idx = jax.random.randint(k_idx, (batch,), 0, num_nodes, jnp.int32)

    model = FastBaseHeteroSGAPModelPallas(prop_steps, feat_dim, num_subgraphs,
                                          num_classes, k_model)
    model.preprocess(table)

    out = jax.block_until_ready(model.forward(idx))

    # Pure-JAX reference: gather -> FastOneDimConvolution aggregator -> linear.
    x = table[idx]                                               # [B, F, S]
    agg = jnp.sum(x * model.agg_weight[None, None, :], axis=-1)  # [B, F]
    ref = jnp.dot(agg, model.weight,
                  precision=jax.lax.Precision.HIGHEST) + model.bias[None, :]

    assert out.shape == (batch, num_classes)
    assert jnp.allclose(out, ref, atol=1e-3, rtol=1e-3), \
        float(jnp.max(jnp.abs(out - ref)))
    print("KERNEL_OK")
</pallas_src>

<mosaic_0001>
module attributes {stable_mosaic.version = 11 : i64} {
  func.func @_fast_hetero_sgap_kernel(%arg0: i32, %arg1: i32, %arg2: memref<512xi32, #tpu.memory_space<smem>>, %arg3: memref<256x1024xf32, #tpu.memory_space<any>>, %arg4: memref<1x1024xf32, #tpu.memory_space<vmem>>, %arg5: memref<128x128xf32, #tpu.memory_space<vmem>>, %arg6: memref<1x128xf32, #tpu.memory_space<vmem>>, %arg7: memref<128x128xf32, #tpu.memory_space<vmem>>, %arg8: memref<2x128x1024xf32, #tpu.memory_space<vmem>>, %arg9: memref<2x!tpu.dma_semaphore, #tpu.memory_space<semaphore_mem>>) attributes {dimension_semantics = [#tpu.dimension_semantics<parallel>, #tpu.dimension_semantics<arbitrary>], iteration_bounds = array<i64: 2, 2>, scalar_prefetch = 1 : i64, scratch_operands = 2 : i64, tpu.core_type = #tpu.core_type<tc>, window_params = [{}, {pipeline_mode = #tpu.pipeline_mode<synchronous>, transform_indices = @transform_1, window_bounds = array<i64: 1, 1024>}, {pipeline_mode = #tpu.pipeline_mode<synchronous>, transform_indices = @transform_2, window_bounds = array<i64: 128, 128>}, {pipeline_mode = #tpu.pipeline_mode<synchronous>, transform_indices = @transform_3, window_bounds = array<i64: 1, 128>}, {transform_indices = @transform_4, window_bounds = array<i64: 128, 128>}]} {
    %c2_i32 = arith.constant 2 : i32
    %0 = arith.muli %arg0, %c2_i32 : i32
    %1 = arith.addi %0, %arg1 : i32
    %c0_i32 = arith.constant 0 : i32
    %2 = arith.cmpi eq, %arg1, %c0_i32 : i32
    %3 = arith.extui %2 : i1 to i32
    %c0_i32_0 = arith.constant 0 : i32
    %4 = arith.cmpi ne, %3, %c0_i32_0 : i32
    scf.if %4 {
      %c0_i32_42 = arith.constant 0 : i32
      %c128_i32_43 = arith.constant 128 : i32
      %81 = arith.addi %c0_i32_42, %c128_i32_43 : i32
      %c1_i32_44 = arith.constant 1 : i32
      scf.for %arg10 = %c0_i32_42 to %81 step %c1_i32_44  : i32 {
        %c1_i32_46 = arith.constant 1 : i32
        %82 = arith.muli %arg10, %c1_i32_46 : i32
        %c0_i32_47 = arith.constant 0 : i32
        %83 = arith.addi %c0_i32_47, %82 : i32
        %c128_i32_48 = arith.constant 128 : i32
        %84 = arith.muli %1, %c128_i32_48 : i32
        %85 = arith.addi %84, %83 : i32
        %86 = arith.index_cast %85 : i32 to index
        %87 = memref.load %arg2[%86] : memref<512xi32, #tpu.memory_space<smem>>
        %c0_i32_49 = arith.constant 0 : i32
        %c0_i32_50 = arith.constant 0 : i32
        %c0_i32_51 = arith.constant 0 : i32
        %88 = tpu.memref_slice %arg3[%87, %c0_i32_51] : memref<256x1024xf32, #tpu.memory_space<any>> -> memref<1x1024xf32, #tpu.memory_space<any>>
        %89 = tpu.memref_squeeze %88 : memref<1x1024xf32, #tpu.memory_space<any>> -> memref<1024xf32, #tpu.memory_space<any>>
        %c0_i32_52 = arith.constant 0 : i32
        %90 = tpu.memref_slice %arg8[%c0_i32_49, %83, %c0_i32_52] : memref<2x128x1024xf32, #tpu.memory_space<vmem>> -> memref<1x1x1024xf32, #tpu.memory_space<vmem>>
        %91 = tpu.memref_squeeze %90 : memref<1x1x1024xf32, #tpu.memory_space<vmem>> -> memref<1024xf32, #tpu.memory_space<vmem>>
        %92 = tpu.memref_slice %arg9[%c0_i32_50] : memref<2x!tpu.dma_semaphore, #tpu.memory_space<semaphore_mem>> -> memref<1x!tpu.dma_semaphore, #tpu.memory_space<semaphore_mem>>
        %93 = tpu.memref_squeeze %92 : memref<1x!tpu.dma_semaphore, #tpu.memory_space<semaphore_mem>> -> memref<!tpu.dma_semaphore, #tpu.memory_space<semaphore_mem>>
        tpu.enqueue_dma source(%89 : memref<1024xf32, #tpu.memory_space<any>>) target(%91 : memref<1024xf32, #tpu.memory_space<vmem>>) target_semaphore(%93 : memref<!tpu.dma_semaphore, #tpu.memory_space<semaphore_mem>>)
      }
      %c128_i32_45 = arith.constant 128 : i32
    } else {
    }
    %c1_i32 = arith.constant 1 : i32
    %5 = arith.addi %arg1, %c1_i32 : i32
    %c2_i32_1 = arith.constant 2 : i32
    %6 = arith.cmpi slt, %5, %c2_i32_1 : i32
    %7 = arith.extui %6 : i1 to i32
    %c0_i32_2 = arith.constant 0 : i32
    %8 = arith.cmpi ne, %7, %c0_i32_2 : i32
    scf.if %8 {
      %c1_i32_42 = arith.constant 1 : i32
      %81 = arith.addi %1, %c1_i32_42 : i32
      %c1_i32_43 = arith.constant 1 : i32
      %82 = arith.addi %arg1, %c1_i32_43 : i32
      %c2_i32_44 = arith.constant 2 : i32
      %c0_i32_45 = arith.constant 0 : i32
      %83 = arith.cmpi eq, %c2_i32_44, %c0_i32_45 : i32
      %c1_i32_46 = arith.constant 1 : i32
      %84 = arith.select %83, %c1_i32_46, %c2_i32_44 : i32
      %85 = arith.remsi %82, %84 : i32
      %c0_i32_47 = arith.constant 0 : i32
      %86 = arith.cmpi ne, %85, %c0_i32_47 : i32
      %c0_i32_48 = arith.constant 0 : i32
      %87 = arith.cmpi slt, %85, %c0_i32_48 : i32
      %c0_i32_49 = arith.constant 0 : i32
      %88 = arith.cmpi slt, %84, %c0_i32_49 : i32
      %89 = arith.xori %87, %88 : i1
      %90 = arith.andi %89, %86 : i1
      %91 = arith.addi %85, %84 : i32
      %92 = arith.select %90, %91, %85 : i32
      %c0_i32_50 = arith.constant 0 : i32
      %c128_i32_51 = arith.constant 128 : i32
      %93 = arith.addi %c0_i32_50, %c128_i32_51 : i32
      %c1_i32_52 = arith.constant 1 : i32
      scf.for %arg10 = %c0_i32_50 to %93 step %c1_i32_52  : i32 {
        %c1_i32_54 = arith.constant 1 : i32
        %94 = arith.muli %arg10, %c1_i32_54 : i32
        %c0_i32_55 = arith.constant 0 : i32
        %95 = arith.addi %c0_i32_55, %94 : i32
        %c128_i32_56 = arith.constant 128 : i32
        %96 = arith.muli %81, %c128_i32_56 : i32
        %97 = arith.addi %96, %95 : i32
        %98 = arith.index_cast %97 : i32 to index
        %99 = memref.load %arg2[%98] : memref<512xi32, #tpu.memory_space<smem>>
        %c0_i32_57 = arith.constant 0 : i32
        %100 = tpu.memref_slice %arg3[%99, %c0_i32_57] : memref<256x1024xf32, #tpu.memory_space<any>> -> memref<1x1024xf32, #tpu.memory_space<any>>
        %101 = tpu.memref_squeeze %100 : memref<1x1024xf32, #tpu.memory_space<any>> -> memref<1024xf32, #tpu.memory_space<any>>
        %c0_i32_58 = arith.constant 0 : i32
        %102 = tpu.memref_slice %arg8[%92, %95, %c0_i32_58] : memref<2x128x1024xf32, #tpu.memory_space<vmem>> -> memref<1x1x1024xf32, #tpu.memory_space<vmem>>
        %103 = tpu.memref_squeeze %102 : memref<1x1x1024xf32, #tpu.memory_space<vmem>> -> memref<1024xf32, #tpu.memory_space<vmem>>
        %104 = tpu.memref_slice %arg9[%92] : memref<2x!tpu.dma_semaphore, #tpu.memory_space<semaphore_mem>> -> memref<1x!tpu.dma_semaphore, #tpu.memory_space<semaphore_mem>>
        %105 = tpu.memref_squeeze %104 : memref<1x!tpu.dma_semaphore, #tpu.memory_space<semaphore_mem>> -> memref<!tpu.dma_semaphore, #tpu.memory_space<semaphore_mem>>
        tpu.enqueue_dma source(%101 : memref<1024xf32, #tpu.memory_space<any>>) target(%103 : memref<1024xf32, #tpu.memory_space<vmem>>) target_semaphore(%105 : memref<!tpu.dma_semaphore, #tpu.memory_space<semaphore_mem>>)
      }
      %c128_i32_53 = arith.constant 128 : i32
    } else {
    }
    %c2_i32_3 = arith.constant 2 : i32
    %c0_i32_4 = arith.constant 0 : i32
    %9 = arith.cmpi eq, %c2_i32_3, %c0_i32_4 : i32
    %c1_i32_5 = arith.constant 1 : i32
    %10 = arith.select %9, %c1_i32_5, %c2_i32_3 : i32
    %11 = arith.remsi %arg1, %10 : i32
    %c0_i32_6 = arith.constant 0 : i32
    %12 = arith.cmpi ne, %11, %c0_i32_6 : i32
    %c0_i32_7 = arith.constant 0 : i32
    %13 = arith.cmpi slt, %11, %c0_i32_7 : i32
    %c0_i32_8 = arith.constant 0 : i32
    %14 = arith.cmpi slt, %10, %c0_i32_8 : i32
    %15 = arith.xori %13, %14 : i1
    %16 = arith.andi %15, %12 : i1
    %17 = arith.addi %11, %10 : i32
    %18 = arith.select %16, %17, %11 : i32
    %c0_i32_9 = arith.constant 0 : i32
    %c128_i32 = arith.constant 128 : i32
    %19 = arith.addi %c0_i32_9, %c128_i32 : i32
    %c1_i32_10 = arith.constant 1 : i32
    scf.for %arg10 = %c0_i32_9 to %19 step %c1_i32_10  : i32 {
      %c1_i32_42 = arith.constant 1 : i32
      %81 = arith.muli %arg10, %c1_i32_42 : i32
      %c0_i32_43 = arith.constant 0 : i32
      %82 = arith.addi %c0_i32_43, %81 : i32
      %c0_i32_44 = arith.constant 0 : i32
      %c0_i32_45 = arith.constant 0 : i32
      %83 = tpu.memref_slice %arg3[%c0_i32_44, %c0_i32_45] : memref<256x1024xf32, #tpu.memory_space<any>> -> memref<1x1024xf32, #tpu.memory_space<any>>
      %84 = tpu.memref_squeeze %83 : memref<1x1024xf32, #tpu.memory_space<any>> -> memref<1024xf32, #tpu.memory_space<any>>
      %c0_i32_46 = arith.constant 0 : i32
      %85 = tpu.memref_slice %arg8[%18, %82, %c0_i32_46] : memref<2x128x1024xf32, #tpu.memory_space<vmem>> -> memref<1x1x1024xf32, #tpu.memory_space<vmem>>
      %86 = tpu.memref_squeeze %85 : memref<1x1x1024xf32, #tpu.memory_space<vmem>> -> memref<1024xf32, #tpu.memory_space<vmem>>
      %87 = tpu.memref_slice %arg9[%18] : memref<2x!tpu.dma_semaphore, #tpu.memory_space<semaphore_mem>> -> memref<1x!tpu.dma_semaphore, #tpu.memory_space<semaphore_mem>>
      %88 = tpu.memref_squeeze %87 : memref<1x!tpu.dma_semaphore, #tpu.memory_space<semaphore_mem>> -> memref<!tpu.dma_semaphore, #tpu.memory_space<semaphore_mem>>
      tpu.wait_dma2 semaphore(%88 : memref<!tpu.dma_semaphore, #tpu.memory_space<semaphore_mem>>) src(%84 : memref<1024xf32, #tpu.memory_space<any>>) dst(%86 : memref<1024xf32, #tpu.memory_space<vmem>>)
    }
    %c128_i32_11 = arith.constant 128 : i32
    %20 = arith.index_cast %18 : i32 to index
    %c0 = arith.constant 0 : index
    %c0_12 = arith.constant 0 : index
    %21 = vector.load %arg8[%20, %c0, %c0_12] : memref<2x128x1024xf32, #tpu.memory_space<vmem>>, vector<1x128x128xf32>
    %22 = vector.shape_cast %21 : vector<1x128x128xf32> to vector<128x128xf32>
    %c0_13 = arith.constant 0 : index
    %c0_14 = arith.constant 0 : index
    %23 = vector.load %arg4[%c0_13, %c0_14] : memref<1x1024xf32, #tpu.memory_space<vmem>>, vector<1x128xf32>
    %24 = vector.broadcast %23 : vector<1x128xf32> to vector<128x128xf32>
    %25 = arith.mulf %22, %24 : vector<128x128xf32>
    %26 = arith.index_cast %18 : i32 to index
    %c0_15 = arith.constant 0 : index
    %c128 = arith.constant 128 : index
    %27 = vector.load %arg8[%26, %c0_15, %c128] : memref<2x128x1024xf32, #tpu.memory_space<vmem>>, vector<1x128x128xf32>
    %28 = vector.shape_cast %27 : vector<1x128x128xf32> to vector<128x128xf32>
    %c0_16 = arith.constant 0 : index
    %c128_17 = arith.constant 128 : index
    %29 = vector.load %arg4[%c0_16, %c128_17] : memref<1x1024xf32, #tpu.memory_space<vmem>>, vector<1x128xf32>
    %30 = vector.broadcast %29 : vector<1x128xf32> to vector<128x128xf32>
    %31 = arith.mulf %28, %30 : vector<128x128xf32>
    %32 = arith.addf %25, %31 : vector<128x128xf32>
    %33 = arith.index_cast %18 : i32 to index
    %c0_18 = arith.constant 0 : index
    %c256 = arith.constant 256 : index
    %34 = vector.load %arg8[%33, %c0_18, %c256] : memref<2x128x1024xf32, #tpu.memory_space<vmem>>, vector<1x128x128xf32>
    %35 = vector.shape_cast %34 : vector<1x128x128xf32> to vector<128x128xf32>
    %c0_19 = arith.constant 0 : index
    %c256_20 = arith.constant 256 : index
    %36 = vector.load %arg4[%c0_19, %c256_20] : memref<1x1024xf32, #tpu.memory_space<vmem>>, vector<1x128xf32>
    %37 = vector.broadcast %36 : vector<1x128xf32> to vector<128x128xf32>
    %38 = arith.mulf %35, %37 : vector<128x128xf32>
    %39 = arith.addf %32, %38 : vector<128x128xf32>
    %40 = arith.index_cast %18 : i32 to index
    %c0_21 = arith.constant 0 : index
    %c384 = arith.constant 384 : index
    %41 = vector.load %arg8[%40, %c0_21, %c384] : memref<2x128x1024xf32, #tpu.memory_space<vmem>>, vector<1x128x128xf32>
    %42 = vector.shape_cast %41 : vector<1x128x128xf32> to vector<128x128xf32>
    %c0_22 = arith.constant 0 : index
    %c384_23 = arith.constant 384 : index
    %43 = vector.load %arg4[%c0_22, %c384_23] : memref<1x1024xf32, #tpu.memory_space<vmem>>, vector<1x128xf32>
    %44 = vector.broadcast %43 : vector<1x128xf32> to vector<128x128xf32>
    %45 = arith.mulf %42, %44 : vector<128x128xf32>
    %46 = arith.addf %39, %45 : vector<128x128xf32>
    %47 = arith.index_cast %18 : i32 to index
    %c0_24 = arith.constant 0 : index
    %c512 = arith.constant 512 : index
    %48 = vector.load %arg8[%47, %c0_24, %c512] : memref<2x128x1024xf32, #tpu.memory_space<vmem>>, vector<1x128x128xf32>
    %49 = vector.shape_cast %48 : vector<1x128x128xf32> to vector<128x128xf32>
    %c0_25 = arith.constant 0 : index
    %c512_26 = arith.constant 512 : index
    %50 = vector.load %arg4[%c0_25, %c512_26] : memref<1x1024xf32, #tpu.memory_space<vmem>>, vector<1x128xf32>
    %51 = vector.broadcast %50 : vector<1x128xf32> to vector<128x128xf32>
    %52 = arith.mulf %49, %51 : vector<128x128xf32>
    %53 = arith.addf %46, %52 : vector<128x128xf32>
    %54 = arith.index_cast %18 : i32 to index
    %c0_27 = arith.constant 0 : index
    %c640 = arith.constant 640 : index
    %55 = vector.load %arg8[%54, %c0_27, %c640] : memref<2x128x1024xf32, #tpu.memory_space<vmem>>, vector<1x128x128xf32>
    %56 = vector.shape_cast %55 : vector<1x128x128xf32> to vector<128x128xf32>
    %c0_28 = arith.constant 0 : index
    %c640_29 = arith.constant 640 : index
    %57 = vector.load %arg4[%c0_28, %c640_29] : memref<1x1024xf32, #tpu.memory_space<vmem>>, vector<1x128xf32>
    %58 = vector.broadcast %57 : vector<1x128xf32> to vector<128x128xf32>
    %59 = arith.mulf %56, %58 : vector<128x128xf32>
    %60 = arith.addf %53, %59 : vector<128x128xf32>
    %61 = arith.index_cast %18 : i32 to index
    %c0_30 = arith.constant 0 : index
    %c768 = arith.constant 768 : index
    %62 = vector.load %arg8[%61, %c0_30, %c768] : memref<2x128x1024xf32, #tpu.memory_space<vmem>>, vector<1x128x128xf32>
    %63 = vector.shape_cast %62 : vector<1x128x128xf32> to vector<128x128xf32>
    %c0_31 = arith.constant 0 : index
    %c768_32 = arith.constant 768 : index
    %64 = vector.load %arg4[%c0_31, %c768_32] : memref<1x1024xf32, #tpu.memory_space<vmem>>, vector<1x128xf32>
    %65 = vector.broadcast %64 : vector<1x128xf32> to vector<128x128xf32>
    %66 = arith.mulf %63, %65 : vector<128x128xf32>
    %67 = arith.addf %60, %66 : vector<128x128xf32>
    %68 = arith.index_cast %18 : i32 to index
    %c0_33 = arith.constant 0 : index
    %c896 = arith.constant 896 : index
    %69 = vector.load %arg8[%68, %c0_33, %c896] : memref<2x128x1024xf32, #tpu.memory_space<vmem>>, vector<1x128x128xf32>
    %70 = vector.shape_cast %69 : vector<1x128x128xf32> to vector<128x128xf32>
    %c0_34 = arith.constant 0 : index
    %c896_35 = arith.constant 896 : index
    %71 = vector.load %arg4[%c0_34, %c896_35] : memref<1x1024xf32, #tpu.memory_space<vmem>>, vector<1x128xf32>
    %72 = vector.broadcast %71 : vector<1x128xf32> to vector<128x128xf32>
    %73 = arith.mulf %70, %72 : vector<128x128xf32>
    %74 = arith.addf %67, %73 : vector<128x128xf32>
    %c0_36 = arith.constant 0 : index
    %c0_37 = arith.constant 0 : index
    %75 = vector.load %arg5[%c0_36, %c0_37] : memref<128x128xf32, #tpu.memory_space<vmem>>, vector<128x128xf32>
    %cst = arith.constant dense<0.000000e+00> : vector<128x128xf32>
    %76 = tpu.matmul %74, %75, %cst {dimension_numbers = #tpu.dot_dimension_numbers<[1], [0], [0], [1], [0, 0, 1, 1], [], []>} : vector<128x128xf32>, vector<128x128xf32>, vector<128x128xf32> -> vector<128x128xf32>
    %c0_38 = arith.constant 0 : index
    %c0_39 = arith.constant 0 : index
    %77 = vector.load %arg6[%c0_38, %c0_39] : memref<1x128xf32, #tpu.memory_space<vmem>>, vector<1x128xf32>
    %78 = vector.broadcast %77 : vector<1x128xf32> to vector<128x128xf32>
    %79 = arith.addf %76, %78 : vector<128x128xf32>
    %c0_40 = arith.constant 0 : index
    %c0_41 = arith.constant 0 : index
    %80 = vector.load %arg7[%c0_40, %c0_41] : memref<128x128xf32, #tpu.memory_space<vmem>>, vector<128x128xf32>
    tpu.vector_store %arg7[%c0_40, %c0_41], %79 {strides = array<i32>} : memref<128x128xf32, #tpu.memory_space<vmem>>, vector<128x128xf32>,
    return
  }
  func.func @transform_1(%arg0: i32, %arg1: i32, %arg2: memref<512xi32, #tpu.memory_space<smem>>) -> (i32, i32) {
    %c0_i32 = arith.constant 0 : i32
    %c0_i32_0 = arith.constant 0 : i32
    %c0_i32_1 = arith.constant 0 : i32
    return %c0_i32, %c0_i32_0 : i32, i32
  }
  func.func @transform_2(%arg0: i32, %arg1: i32, %arg2: memref<512xi32, #tpu.memory_space<smem>>) -> (i32, i32) {
    %c0_i32 = arith.constant 0 : i32
    %c0_i32_0 = arith.constant 0 : i32
    %c0_i32_1 = arith.constant 0 : i32
    return %c0_i32, %c0_i32_0 : i32, i32
  }
  func.func @transform_3(%arg0: i32, %arg1: i32, %arg2: memref<512xi32, #tpu.memory_space<smem>>) -> (i32, i32) {
    %c0_i32 = arith.constant 0 : i32
    %c0_i32_0 = arith.constant 0 : i32
    %c0_i32_1 = arith.constant 0 : i32
    return %c0_i32, %c0_i32_0 : i32, i32
  }
  func.func @transform_4(%arg0: i32, %arg1: i32, %arg2: memref<512xi32, #tpu.memory_space<smem>>) -> (i32, i32) {
    %c2_i32 = arith.constant 2 : i32
    %0 = arith.muli %arg0, %c2_i32 : i32
    %1 = arith.addi %0, %arg1 : i32
    %c0_i32 = arith.constant 0 : i32
    %c0_i32_0 = arith.constant 0 : i32
    return %1, %c0_i32 : i32, i32
  }
}

</mosaic_0001>

<llo_original>
// kernel: tpu_custom_call.1
$region0: #{tpu_custom_call.1}
  #allocation0 [shape = 'u32[]', space=smem, size = 0x4, offset = 0x4, fixed_abs, tag = 'smem constant byte address 0x4 - core index']
  #allocation1 [shape = 'u32[144,128]{1,0:T(1,128)}', space=vmem, size = 0x12000, scoped, tag = 'internal scratch']
  #allocation2 [shape = 'f32[2,128,1024]{2,1,0:T(8,128)}', space=vmem, size = 0x100000, scoped, tag = 'scratch operand']
  #allocation3 [shape = 's32[2]{0}', space=sflag, size = 0x8, scoped, tag = 'scratch operand']
  #allocation4 [shape = 's32[1]{0}', space=sflag, size = 0x4, scoped, tag = 'scoped memory for tpu_custom_call.1']
  #allocation5 [shape = 'u8[2048]{0}', space=smem, size = 0x800, scoped, tag = 'prefetched SMEM operand 0']
  #allocation12 [shape = 's32[]', space=sflag, size = 0x4, offset = 0, fixed_abs, tag = 'sflag constant byte address 0x0 - dummy sync flag']
  #allocation13 [shape = 's32[]', space=sflag, size = 0x4, offset = 0, fixed_abs, tag = 'sflag constant byte address 0x0 - dummy sync flag']
  %s0 = inlined_call_operand.hbm [shape: s32[512], index: 0, kind: input, shape index: {}]
  %s1 = inlined_call_operand.hbm [shape: f32[256,1024], index: 1, kind: input, shape index: {}]
  %s2 = inlined_call_operand.hbm [shape: f32[1,1024], index: 2, kind: input, shape index: {}]
  %s3 = inlined_call_operand.hbm [shape: f32[128,128], index: 3, kind: input, shape index: {}]
  %s4 = inlined_call_operand.vmem [shape: f32[1,128], index: 4, kind: input, shape index: {}]
  %s5 = inlined_call_operand.hbm [shape: f32[512,128], index: 5, kind: output, shape index: {}]
  %s6 = sld [smem:[#allocation0]]
  $region82: #{tpu_custom_call.1} parent=0
    _
  %s8 = ssub.s32 1, %s6
  %s9 = scalar_select 0, %s8, %s6
  %11 = dma.hbm_to_smem %s0, 64, [#allocation5], [#allocation4]
  %12 = dma.done [#allocation4], 64
  %13 = sfence
  $region1: #{tpu_custom_call.1} parent=0
    #allocation6 [shape = 'u8[4096]{0}', space=vmem, size = 0x1000, scoped, tag = 'input window, operand 2, single buffered']
    #allocation7 [shape = 's32[2]{0}', space=sflag, size = 0x8, scoped, tag = 'scoped memory for tpu_custom_call.1']
    #allocation8 [shape = 's32[2]{0}', space=sflag, size = 0x8, scoped, tag = 'scoped memory for tpu_custom_call.1']
    #allocation9 [shape = 'u8[65536]{0}', space=vmem, size = 0x10000, scoped, tag = 'input window, operand 3, single buffered']
    #allocation10 [shape = 's32[1]{0}', space=sflag, size = 0x4, scoped, tag = 'scoped memory for tpu_custom_call.1']
    #allocation11 [shape = 'u8[131072]{0}', space=vmem, size = 0x20000, scoped, tag = 'output window, operand 0']
    %14 = vsyncpa [#allocation7], 0
    %15 = vsyncpa [#allocation10], 0
    %16 = vsyncpa [#allocation8], 0
    %s17 = scalar_lea.sflag [#allocation8], 1
    %18 = vsyncpa %s17, 0
    loop: start=0, step=1, limit=6
    $region2: #{tpu_custom_call.1} parent=1 // loop_pre_header
      _
    $region3: #{tpu_custom_call.1} parent=1 // loop_header
      %s20 = sphi 0, %s24
      %p21 = scmp.ge.s32.totalorder %s20, 6
      %s27 = sphi 0, %s39
      %s28 = sphi 0, %s35
      %s29 = sphi 0, %s27
      %s30 = sphi 0, %s28
      %s31 = sphi 0, %s29
      %s32 = sphi 0, %s30
      %s40 = sphi 0, %s40
      %s42 = sphi 0, %s40
      %s43 = sphi 0, %s42
      %s57 = sphi 0, %s43
      %s61 = sphi 0, %s61
      %s63 = sphi 0, %s61
      %s64 = sphi 0, %s63
      %s78 = sphi 0, %s64
      %s82 = sphi 0, %s82
      %s84 = sphi 0, %s82
      %s85 = sphi 0, %s84
      %s99 = sphi 0, %s85
      %s109 = sphi 0, %s111
      %s112 = sphi 0, %s109
      %s113 = sphi 0, %s112
      %s129 = sphi 0, %s113
    $region4: #{tpu_custom_call.1} parent=1 // loop_header_branch
      %23 = sbr.rel (%p21) target = $region8
    $region5: #{tpu_custom_call.1} parent=1 // loop_body
      %s25 = ssub.s32 %s20, 1
      %s26 = ssub.s32 %s20, 2
      %s33 = sadd.s32 1, %s28
      %p34 = scmp.ge.s32.totalorder %s33, 2
      %s35 = scalar_select %p34, 0, %s33
      %s36 = sadd.s32 1, %s27
      %s37 = scalar_select %p34, %s36, %s27
      %p38 = scmp.ge.s32.totalorder %s37, 2
      %s39 = scalar_select %p38, 0, %s37
      %s41 = sadd.s32 %s40, 1
      %p44 = scmp.eq.s32.totalorder %s20, 3
      %p45 = scmp.ne.s32.totalorder %s40, %s42
      %p46 = scmp.eq.s32.totalorder %s20, 0
      %p47 = por %p45, %p46
      %p48 = scmp.ne.s32.totalorder %s40, %s42
      %p49 = scmp.eq.s32.totalorder %s25, 3
      %p50 = por %p48, %p49
      %p51 = scmp.ne.s32.totalorder %s42, %s43
      %p52 = scmp.eq.s32.totalorder %s25, 0
      %p53 = por %p51, %p52
      %p54 = scmp.ne.s32.totalorder %s42, %s43
      %p55 = scmp.eq.s32.totalorder %s26, 3
      %p56 = por %p54, %p55
      %p58 = scmp.ne.s32.totalorder %s43, %s57
      %p59 = scmp.eq.s32.totalorder %s26, 0
      %p60 = por %p58, %p59
      %s62 = sadd.s32 %s61, 1
      %p65 = scmp.eq.s32.totalorder %s20, 3
      %p66 = scmp.ne.s32.totalorder %s61, %s63
      %p67 = scmp.eq.s32.totalorder %s20, 0
      %p68 = por %p66, %p67
      %p69 = scmp.ne.s32.totalorder %s61, %s63
      %p70 = scmp.eq.s32.totalorder %s25, 3
      %p71 = por %p69, %p70
      %p72 = scmp.ne.s32.totalorder %s63, %s64
      %p73 = scmp.eq.s32.totalorder %s25, 0
      %p74 = por %p72, %p73
      %p75 = scmp.ne.s32.totalorder %s63, %s64
      %p76 = scmp.eq.s32.totalorder %s26, 3
      %p77 = por %p75, %p76
      %p79 = scmp.ne.s32.totalorder %s64, %s78
      %p80 = scmp.eq.s32.totalorder %s26, 0
      %p81 = por %p79, %p80
      %s83 = sadd.s32 %s82, 1
      %p86 = scmp.eq.s32.totalorder %s20, 3
      %p87 = scmp.ne.s32.totalorder %s82, %s84
      %p88 = scmp.eq.s32.totalorder %s20, 0
      %p89 = por %p87, %p88
      %p90 = scmp.ne.s32.totalorder %s82, %s84
      %p91 = scmp.eq.s32.totalorder %s25, 3
      %p92 = por %p90, %p91
      %p93 = scmp.ne.s32.totalorder %s84, %s85
      %p94 = scmp.eq.s32.totalorder %s25, 0
      %p95 = por %p93, %p94
      %p96 = scmp.ne.s32.totalorder %s84, %s85
      %p97 = scmp.eq.s32.totalorder %s26, 3
      %p98 = por %p96, %p97
      %p100 = scmp.ne.s32.totalorder %s85, %s99
      %p101 = scmp.eq.s32.totalorder %s26, 0
      %p102 = por %p100, %p101
      %s103 = smul.u32 %s27, 2
      %s104 = sadd.s32 %s103, %s28
      %s105 = smul.u32 %s39, 2
      %s106 = sadd.s32 %s105, %s35
      %s107 = ssub.s32 %s104, %s106
      %p108 = scmp.eq.s32.totalorder %s107, 0
      %s110 = sadd.s32 %s109, 1
      %s111 = scalar_select %p108, %s109, %s110
      %p114 = pneg %p108
      %p115 = scmp.eq.s32.totalorder %s20, 3
      %p116 = por %p114, %p115
      %p117 = scmp.ne.s32.totalorder %s109, %s112
      %p118 = scmp.eq.s32.totalorder %s20, 0
      %p119 = por %p117, %p118
      %p120 = scmp.ne.s32.totalorder %s109, %s112
      %p121 = scmp.eq.s32.totalorder %s25, 3
      %p122 = por %p120, %p121
      %p123 = scmp.ne.s32.totalorder %s112, %s113
      %p124 = scmp.eq.s32.totalorder %s25, 0
      %p125 = por %p123, %p124
      %p126 = scmp.ne.s32.totalorder %s112, %s113
      %p127 = scmp.eq.s32.totalorder %s26, 3
      %p128 = por %p126, %p127
      %p130 = scmp.ne.s32.totalorder %s113, %s129
      %p131 = scmp.eq.s32.totalorder %s26, 0
      %p132 = por %p130, %p131
      %p133 = scmp.le.s32.totalorder 1, %s20
      %p134 = scmp.lt.s32.totalorder %s20, 5
      %p135 = pnand %p133, %p134
      %p136 = pneg %p135
      // Predicated region
      $region9: #{tpu_custom_call.1} parent=5 // pred_check
        _
      $region10: #{tpu_custom_call.1} parent=5 // pred_check_branch
        %138 = sbr.rel (%p135) target = $region12
      $region11: #{tpu_custom_call.1} parent=5 // pred_region
        %s139 = ssub.s32 %s20, 1
        // Predicated region
        $region13: #{tpu_custom_call.1} parent=11 // pred_check
          %p140 = pneg %p53
        $region14: #{tpu_custom_call.1} parent=11 // pred_check_branch
          %142 = sbr.rel (%p140) target = $region16
        $region15: #{tpu_custom_call.1} parent=11 // pred_region
          %s144 = ssub.s32 128, 128
          %145 = vsyncadd [#allocation7], %s144
          %s147 = sshll.u32 [#allocation6], 4
          %s148 = int_to_ptr.vmem [resolvable:$true] %s147
          %150 = dma.hbm_to_vmem [thread:$0]  %s2, 128, %s148, [#allocation7]
        $region16: #{tpu_custom_call.1} parent=11 // pred_fallthru
          _
        // Predicated region
        $region17: #{tpu_custom_call.1} parent=11 // pred_check
          %p151 = pneg %p74
        $region18: #{tpu_custom_call.1} parent=11 // pred_check_branch
          %153 = sbr.rel (%p151) target = $region20
        $region19: #{tpu_custom_call.1} parent=11 // pred_region
          %s155 = ssub.s32 2048, 2048
          %156 = vsyncadd [#allocation10], %s155
          %s157 = sshll.u32 [#allocation9], 4
          %s158 = int_to_ptr.vmem [resolvable:$true] %s157
          %163 = dma.hbm_to_vmem [thread:$0]  %s3, 2048, %s158, [#allocation10], 128, 128, 8
        $region20: #{tpu_custom_call.1} parent=11 // pred_fallthru
          _
        // Predicated region
        $region21: #{tpu_custom_call.1} parent=11 // pred_check
          %p164 = pneg %p95
        $region22: #{tpu_custom_call.1} parent=11 // pred_check_branch
          %166 = sbr.rel (%p164) target = $region24
        $region23: #{tpu_custom_call.1} parent=11 // pred_region
          _
        $region24: #{tpu_custom_call.1} parent=11 // pred_fallthru
          _
      $region12: #{tpu_custom_call.1} parent=5 // pred_fallthru
        _
      %p167 = scmp.lt.s32.totalorder %s20, 4
      // Predicated region
      $region25: #{tpu_custom_call.1} parent=5 // pred_check
        %p168 = pneg %p167
      $region26: #{tpu_custom_call.1} parent=5 // pred_check_branch
        %170 = sbr.rel (%p168) target = $region28
      $region27: #{tpu_custom_call.1} parent=5 // pred_region
        _
      $region28: #{tpu_custom_call.1} parent=5 // pred_fallthru
        _
      %p171 = scmp.le.s32.totalorder 1, %s20
      %p172 = scmp.lt.s32.totalorder %s20, 5
      %p173 = pnand %p171, %p172
      %p174 = pneg %p173
      // Predicated region
      $region29: #{tpu_custom_call.1} parent=5 // pred_check
        _
      $region30: #{tpu_custom_call.1} parent=5 // pred_check_branch
        %176 = sbr.rel (%p173) target = $region32
      $region31: #{tpu_custom_call.1} parent=5 // pred_region
        %s177 = ssub.s32 %s20, 1
        // Predicated region
        $region33: #{tpu_custom_call.1} parent=31 // pred_check
          %p178 = pneg %p53
        $region34: #{tpu_custom_call.1} parent=31 // pred_check_branch
          %180 = sbr.rel (%p178) target = $region36
        $region35: #{tpu_custom_call.1} parent=31 // pred_region
          %181 = dma.done [#allocation7], 128
        $region36: #{tpu_custom_call.1} parent=31 // pred_fallthru
          _
        // Predicated region
        $region37: #{tpu_custom_call.1} parent=31 // pred_check
          %p182 = pneg %p74
        $region38: #{tpu_custom_call.1} parent=31 // pred_check_branch
          %184 = sbr.rel (%p182) target = $region40
        $region39: #{tpu_custom_call.1} parent=31 // pred_region
          %185 = dma.done [#allocation10], 2048
        $region40: #{tpu_custom_call.1} parent=31 // pred_fallthru
          _
        %p186 = pneg %p53
        %p187 = pneg %p50
        %p188 = pneg %p74
        %p189 = pneg %p71
        %p190 = pneg %p95
        %p191 = pneg %p92
        %p192 = pneg %p125
        %p193 = pneg %p122
        %s194 = sand.u32 %s112, 1
        %s195 = scalar_lea.sflag [#allocation8], %s194
        %s196 = sand.u32 %s112, 1
        %s197 = smul.addr %s196, 128
        %s198 = scalar_lea.vmem [#allocation11], %s197
        %s199 = smul.u32 %s29, 2
        %s200 = sadd.s32 %s199, %s30
        %s201 = smul.u32 16, %s200
        %s202 = smul.u32 %s29, 2
        %s203 = sadd.s32 %s202, %s30
        %p204 = scmp.eq.s32.totalorder %s30, 0
        // Predicated region
        $region41: #{tpu_custom_call.1} parent=31 // pred_check
          %p205 = pneg %p204
        $region42: #{tpu_custom_call.1} parent=31 // pred_check_branch
          %207 = sbr.rel (%p205) target = $region44
        $region43: #{tpu_custom_call.1} parent=31 // pred_region
          loop: start=0, step=1, limit=128
          $region45: #{tpu_custom_call.1} parent=43 // loop_pre_header
            _
          $region46: #{tpu_custom_call.1} parent=43 // loop_header
            %s209 = sphi 0, %s213
            %p210 = scmp.ge.s32.totalorder %s209, 128
          $region47: #{tpu_custom_call.1} parent=43 // loop_header_branch
            %212 = sbr.rel (%p210) target = $region51
          $region48: #{tpu_custom_call.1} parent=43 // loop_body
            %s214 = smul.u32 %s203, 128
            %s215 = sadd.s32 %s214, %s209
            %s216 = sld [smem:[#allocation5 + %s215]]
            %s217 = sshrl.u32 %s216, 3
            %s218 = sand.u32 %s216, 7
            %s219 = smul.u32 %s217, 64
            %s220 = sadd.s32 %s218, %s219
            %s221 = smul.addr %s220, 16
            %s222 = scalar_lea.hbm %s1, %s221
            %s223 = sshrl.u32 %s209, 3
            %s224 = sand.u32 %s209, 7
            %s225 = smul.u32 %s223, 64
            %s226 = sadd.s32 %s224, %s225
            %s227 = scalar_lea.vmem [#allocation2], %s226
            %s229 = sshll.u32 %s227, 4
            %s230 = int_to_ptr.vmem [resolvable:$true] %s229
            %232 = dma.hbm_to_vmem [thread:$0]  %s222, 128, %s230, [#allocation3], 128, 128, 1
          $region49: #{tpu_custom_call.1} parent=43 // loop_footer
            %s213 = sadd.s32 1, %s209
          $region50: #{tpu_custom_call.1} parent=43 // loop_footer_branch
            %208 = sbr.rel target = $region46
          $region51: #{tpu_custom_call.1} parent=43 // loop_exit
            _
        $region44: #{tpu_custom_call.1} parent=31 // pred_fallthru
          _
        %s233 = sadd.s32 %s30, 1
        %p234 = scmp.lt.s32.totalorder %s233, 2
        // Predicated region
        $region52: #{tpu_custom_call.1} parent=31 // pred_check
          %p235 = pneg %p234
        $region53: #{tpu_custom_call.1} parent=31 // pred_check_branch
          %237 = sbr.rel (%p235) target = $region55
        $region54: #{tpu_custom_call.1} parent=31 // pred_region
          %s238 = sadd.s32 %s203, 1
          %p239 = scmp.lt.s32.totalorder %s233, 0
          %s240 = ssub.s32 0, %s233
          %s241 = scalar_select %p239, %s240, %s233
          %s242 = sand.u32 %s241, 1
          %s243 = ssub.s32 0, %s242
          %s244 = scalar_select %p239, %s243, %s242
          %p245 = scmp.ne.s32.totalorder %s244, 0
          %p246 = scmp.lt.s32.totalorder %s244, 0
          %p247 = pnand %p246, %p245
          %p248 = pneg %p247
          %s249 = sadd.s32 %s244, 2
          %s250 = scalar_select %p248, %s249, %s244
          loop: start=0, step=1, limit=128
          $region56: #{tpu_custom_call.1} parent=54 // loop_pre_header
            _
          $region57: #{tpu_custom_call.1} parent=54 // loop_header
            %s252 = sphi 0, %s256
            %p253 = scmp.ge.s32.totalorder %s252, 128
          $region58: #{tpu_custom_call.1} parent=54 // loop_header_branch
            %255 = sbr.rel (%p253) target = $region62
          $region59: #{tpu_custom_call.1} parent=54 // loop_body
            %s257 = smul.u32 %s238, 128
            %s258 = sadd.s32 %s257, %s252
            %s259 = sld [smem:[#allocation5 + %s258]]
            %s260 = sshrl.u32 %s259, 3
            %s261 = sand.u32 %s259, 7
            %s262 = smul.u32 %s260, 64
            %s263 = sadd.s32 %s261, %s262
            %s264 = smul.addr %s263, 16
            %s265 = scalar_lea.hbm %s1, %s264
            %s266 = sshrl.u32 %s252, 3
            %s267 = sand.u32 %s252, 7
            %s268 = smul.u32 %s266, 64
            %s269 = sadd.s32 %s267, %s268
            %s270 = smul.u32 %s250, 1024
            %s271 = sadd.s32 %s269, %s270
            %s272 = scalar_lea.vmem [#allocation2], %s271
            %s273 = scalar_lea.sflag [#allocation3], %s250
            %s275 = sshll.u32 %s272, 4
            %s276 = int_to_ptr.vmem [resolvable:$true] %s275
            %278 = dma.hbm_to_vmem [thread:$0]  %s265, 128, %s276, %s273, 128, 128, 1
          $region60: #{tpu_custom_call.1} parent=54 // loop_footer
            %s256 = sadd.s32 1, %s252
          $region61: #{tpu_custom_call.1} parent=54 // loop_footer_branch
            %251 = sbr.rel target = $region57
          $region62: #{tpu_custom_call.1} parent=54 // loop_exit
            _
        $region55: #{tpu_custom_call.1} parent=31 // pred_fallthru
          _
        %p279 = scmp.lt.s32.totalorder %s30, 0
        %s280 = ssub.s32 0, %s30
        %s281 = scalar_select %p279, %s280, %s30
        %s282 = sand.u32 %s281, 1
        %s283 = ssub.s32 0, %s282
        %s284 = scalar_select %p279, %s283, %s282
        %p285 = scmp.ne.s32.totalorder %s284, 0
        %p286 = scmp.lt.s32.totalorder %s284, 0
        %p287 = pnand %p286, %p285
        %p288 = pneg %p287
        %s289 = sadd.s32 %s284, 2
        %s290 = scalar_select %p288, %s289, %s284
        loop: start=0, step=1, limit=128
        $region63: #{tpu_custom_call.1} parent=31 // loop_pre_header
          _
        $region64: #{tpu_custom_call.1} parent=31 // loop_header
          %s292 = sphi 0, %s296
          %p293 = scmp.ge.s32.totalorder %s292, 128
        $region65: #{tpu_custom_call.1} parent=31 // loop_header_branch
          %295 = sbr.rel (%p293) target = $region69
        $region66: #{tpu_custom_call.1} parent=31 // loop_body
          %s297 = scalar_lea.sflag [#allocation3], %s290
          %299 = dma.done %s297, 128
        $region67: #{tpu_custom_call.1} parent=31 // loop_footer
          %s296 = sadd.s32 1, %s292
        $region68: #{tpu_custom_call.1} parent=31 // loop_footer_branch
          %291 = sbr.rel target = $region64
        $region69: #{tpu_custom_call.1} parent=31 // loop_exit
          _
        %s300 = smul.u32 %s290, 128
        %s301 = smul.addr %s300, 8
        %s302 = scalar_lea.vmem [#allocation2], %s301
        %v303 = vld [vmem:[%s302] sm:$0xff]
        %v304 = vld [vmem:[%s302 + $0x40] sm:$0xff]
        %v305 = vld [vmem:[%s302 + $0x80] sm:$0xff]
        %v306 = vld [vmem:[%s302 + $0xc0] sm:$0xff]
        %v307 = vld [vmem:[%s302 + $0x100] sm:$0xff]
        %v308 = vld [vmem:[%s302 + $0x140] sm:$0xff]
        %v309 = vld [vmem:[%s302 + $0x180] sm:$0xff]
        %v310 = vld [vmem:[%s302 + $0x1c0] sm:$0xff]
        %v311 = vld [vmem:[%s302 + $0x200] sm:$0xff]
        %v312 = vld [vmem:[%s302 + $0x240] sm:$0xff]
        %v313 = vld [vmem:[%s302 + $0x280] sm:$0xff]
        %v314 = vld [vmem:[%s302 + $0x2c0] sm:$0xff]
        %v315 = vld [vmem:[%s302 + $0x300] sm:$0xff]
        %v316 = vld [vmem:[%s302 + $0x340] sm:$0xff]
        %v317 = vld [vmem:[%s302 + $0x380] sm:$0xff]
        %v318 = vld [vmem:[%s302 + $0x3c0] sm:$0xff]
        %v319 = vld [vmem:[#allocation6] sm:$0x1]
        %v321 = vlaneseq
        %v322 = vshrl.u32 %v321, 7
        %v323 = vsub.s32 0, %v322
        %v324 = vrot.slane %v319, %v323
        %v326 = vmul.f32 %v303, %v324
        %v327 = vmul.f32 %v304, %v324
        %v328 = vmul.f32 %v305, %v324
        %v329 = vmul.f32 %v306, %v324
        %v330 = vmul.f32 %v307, %v324
        %v331 = vmul.f32 %v308, %v324
        %v332 = vmul.f32 %v309, %v324
        %v333 = vmul.f32 %v310, %v324
        %v334 = vmul.f32 %v311, %v324
        %v335 = vmul.f32 %v312, %v324
        %v336 = vmul.f32 %v313, %v324
        %v337 = vmul.f32 %v314, %v324
        %v338 = vmul.f32 %v315, %v324
        %v339 = vmul.f32 %v316, %v324
        %v340 = vmul.f32 %v317, %v324
        %v341 = vmul.f32 %v318, %v324
        %v342 = vld [vmem:[%s302 + $0x8] sm:$0xff]
        %v343 = vld [vmem:[%s302 + $0x48] sm:$0xff]
        %v344 = vld [vmem:[%s302 + $0x88] sm:$0xff]
        %v345 = vld [vmem:[%s302 + $0xc8] sm:$0xff]
        %v346 = vld [vmem:[%s302 + $0x108] sm:$0xff]
        %v347 = vld [vmem:[%s302 + $0x148] sm:$0xff]
        %v348 = vld [vmem:[%s302 + $0x188] sm:$0xff]
        %v349 = vld [vmem:[%s302 + $0x1c8] sm:$0xff]
        %v350 = vld [vmem:[%s302 + $0x208] sm:$0xff]
        %v351 = vld [vmem:[%s302 + $0x248] sm:$0xff]
        %v352 = vld [vmem:[%s302 + $0x288] sm:$0xff]
        %v353 = vld [vmem:[%s302 + $0x2c8] sm:$0xff]
        %v354 = vld [vmem:[%s302 + $0x308] sm:$0xff]
        %v355 = vld [vmem:[%s302 + $0x348] sm:$0xff]
        %v356 = vld [vmem:[%s302 + $0x388] sm:$0xff]
        %v357 = vld [vmem:[%s302 + $0x3c8] sm:$0xff]
        %v358 = vld [vmem:[#allocation6 + $0x1] sm:$0x1]
        %v360 = vlaneseq
        %v361 = vshrl.u32 %v360, 7
        %v362 = vsub.s32 0, %v361
        %v363 = vrot.slane %v358, %v362
        %v365 = vmul.f32 %v342, %v363
        %v366 = vmul.f32 %v343, %v363
        %v367 = vmul.f32 %v344, %v363
        %v368 = vmul.f32 %v345, %v363
        %v369 = vmul.f32 %v346, %v363
        %v370 = vmul.f32 %v347, %v363
        %v371 = vmul.f32 %v348, %v363
        %v372 = vmul.f32 %v349, %v363
        %v373 = vmul.f32 %v350, %v363
        %v374 = vmul.f32 %v351, %v363
        %v375 = vmul.f32 %v352, %v363
        %v376 = vmul.f32 %v353, %v363
        %v377 = vmul.f32 %v354, %v363
        %v378 = vmul.f32 %v355, %v363
        %v379 = vmul.f32 %v356, %v363
        %v380 = vmul.f32 %v357, %v363
        %v381 = vadd.f32 %v326, %v365
        %v382 = vadd.f32 %v327, %v366
        %v383 = vadd.f32 %v328, %v367
        %v384 = vadd.f32 %v329, %v368
        %v385 = vadd.f32 %v330, %v369
        %v386 = vadd.f32 %v331, %v370
        %v387 = vadd.f32 %v332, %v371
        %v388 = vadd.f32 %v333, %v372
        %v389 = vadd.f32 %v334, %v373
        %v390 = vadd.f32 %v335, %v374
        %v391 = vadd.f32 %v336, %v375
        %v392 = vadd.f32 %v337, %v376
        %v393 = vadd.f32 %v338, %v377
        %v394 = vadd.f32 %v339, %v378
        %v395 = vadd.f32 %v340, %v379
        %v396 = vadd.f32 %v341, %v380
        %v397 = vld [vmem:[%s302 + $0x10] sm:$0xff]
        %v398 = vld [vmem:[%s302 + $0x50] sm:$0xff]
        %v399 = vld [vmem:[%s302 + $0x90] sm:$0xff]
        %v400 = vld [vmem:[%s302 + $0xd0] sm:$0xff]
        %v401 = vld [vmem:[%s302 + $0x110] sm:$0xff]
        %v402 = vld [vmem:[%s302 + $0x150] sm:$0xff]
        %v403 = vld [vmem:[%s302 + $0x190] sm:$0xff]
        %v404 = vld [vmem:[%s302 + $0x1d0] sm:$0xff]
        %v405 = vld [vmem:[%s302 + $0x210] sm:$0xff]
        %v406 = vld [vmem:[%s302 + $0x250] sm:$0xff]
        %v407 = vld [vmem:[%s302 + $0x290] sm:$0xff]
        %v408 = vld [vmem:[%s302 + $0x2d0] sm:$0xff]
        %v409 = vld [vmem:[%s302 + $0x310] sm:$0xff]
        %v410 = vld [vmem:[%s302 + $0x350] sm:$0xff]
        %v411 = vld [vmem:[%s302 + $0x390] sm:$0xff]
        %v412 = vld [vmem:[%s302 + $0x3d0] sm:$0xff]
        %v413 = vld [vmem:[#allocation6 + $0x2] sm:$0x1]
        %v415 = vlaneseq
        %v416 = vshrl.u32 %v415, 7
        %v417 = vsub.s32 0, %v416
        %v418 = vrot.slane %v413, %v417
        %v420 = vmul.f32 %v397, %v418
        %v421 = vmul.f32 %v398, %v418
        %v422 = vmul.f32 %v399, %v418
        %v423 = vmul.f32 %v400, %v418
        %v424 = vmul.f32 %v401, %v418
        %v425 = vmul.f32 %v402, %v418
        %v426 = vmul.f32 %v403, %v418
        %v427 = vmul.f32 %v404, %v418
        %v428 = vmul.f32 %v405, %v418
        %v429 = vmul.f32 %v406, %v418
        %v430 = vmul.f32 %v407, %v418
        %v431 = vmul.f32 %v408, %v418
        %v432 = vmul.f32 %v409, %v418
        %v433 = vmul.f32 %v410, %v418
        %v434 = vmul.f32 %v411, %v418
        %v435 = vmul.f32 %v412, %v418
        %v436 = vadd.f32 %v381, %v420
        %v437 = vadd.f32 %v382, %v421
        %v438 = vadd.f32 %v383, %v422
        %v439 = vadd.f32 %v384, %v423
        %v440 = vadd.f32 %v385, %v424
        %v441 = vadd.f32 %v386, %v425
        %v442 = vadd.f32 %v387, %v426
        %v443 = vadd.f32 %v388, %v427
        %v444 = vadd.f32 %v389, %v428
        %v445 = vadd.f32 %v390, %v429
        %v446 = vadd.f32 %v391, %v430
        %v447 = vadd.f32 %v392, %v431
        %v448 = vadd.f32 %v393, %v432
        %v449 = vadd.f32 %v394, %v433
        %v450 = vadd.f32 %v395, %v434
        %v451 = vadd.f32 %v396, %v435
        %v452 = vld [vmem:[%s302 + $0x18] sm:$0xff]
        %v453 = vld [vmem:[%s302 + $0x58] sm:$0xff]
        %v454 = vld [vmem:[%s302 + $0x98] sm:$0xff]
        %v455 = vld [vmem:[%s302 + $0xd8] sm:$0xff]
        %v456 = vld [vmem:[%s302 + $0x118] sm:$0xff]
        %v457 = vld [vmem:[%s302 + $0x158] sm:$0xff]
        %v458 = vld [vmem:[%s302 + $0x198] sm:$0xff]
        %v459 = vld [vmem:[%s302 + $0x1d8] sm:$0xff]
        %v460 = vld [vmem:[%s302 + $0x218] sm:$0xff]
        %v461 = vld [vmem:[%s302 + $0x258] sm:$0xff]
        %v462 = vld [vmem:[%s302 + $0x298] sm:$0xff]
        %v463 = vld [vmem:[%s302 + $0x2d8] sm:$0xff]
        %v464 = vld [vmem:[%s302 + $0x318] sm:$0xff]
        %v465 = vld [vmem:[%s302 + $0x358] sm:$0xff]
        %v466 = vld [vmem:[%s302 + $0x398] sm:$0xff]
        %v467 = vld [vmem:[%s302 + $0x3d8] sm:$0xff]
        %v468 = vld [vmem:[#allocation6 + $0x3] sm:$0x1]
        %v470 = vlaneseq
        %v471 = vshrl.u32 %v470, 7
        %v472 = vsub.s32 0, %v471
        %v473 = vrot.slane %v468, %v472
        %v475 = vmul.f32 %v452, %v473
        %v476 = vmul.f32 %v453, %v473
        %v477 = vmul.f32 %v454, %v473
        %v478 = vmul.f32 %v455, %v473
        %v479 = vmul.f32 %v456, %v473
        %v480 = vmul.f32 %v457, %v473
        %v481 = vmul.f32 %v458, %v473
        %v482 = vmul.f32 %v459, %v473
        %v483 = vmul.f32 %v460, %v473
        %v484 = vmul.f32 %v461, %v473
        %v485 = vmul.f32 %v462, %v473
        %v486 = vmul.f32 %v463, %v473
        %v487 = vmul.f32 %v464, %v473
        %v488 = vmul.f32 %v465, %v473
        %v489 = vmul.f32 %v466, %v473
        %v490 = vmul.f32 %v467, %v473
        %v491 = vadd.f32 %v436, %v475
        %v492 = vadd.f32 %v437, %v476
        %v493 = vadd.f32 %v438, %v477
        %v494 = vadd.f32 %v439, %v478
        %v495 = vadd.f32 %v440, %v479
        %v496 = vadd.f32 %v441, %v480
        %v497 = vadd.f32 %v442, %v481
        %v498 = vadd.f32 %v443, %v482
        %v499 = vadd.f32 %v444, %v483
        %v500 = vadd.f32 %v445, %v484
        %v501 = vadd.f32 %v446, %v485
        %v502 = vadd.f32 %v447, %v486
        %v503 = vadd.f32 %v448, %v487
        %v504 = vadd.f32 %v449, %v488
        %v505 = vadd.f32 %v450, %v489
        %v506 = vadd.f32 %v451, %v490
        %v507 = vld [vmem:[%s302 + $0x20] sm:$0xff]
        %v508 = vld [vmem:[%s302 + $0x60] sm:$0xff]
        %v509 = vld [vmem:[%s302 + $0xa0] sm:$0xff]
        %v510 = vld [vmem:[%s302 + $0xe0] sm:$0xff]
        %v511 = vld [vmem:[%s302 + $0x120] sm:$0xff]
        %v512 = vld [vmem:[%s302 + $0x160] sm:$0xff]
        %v513 = vld [vmem:[%s302 + $0x1a0] sm:$0xff]
        %v514 = vld [vmem:[%s302 + $0x1e0] sm:$0xff]
        %v515 = vld [vmem:[%s302 + $0x220] sm:$0xff]
        %v516 = vld [vmem:[%s302 + $0x260] sm:$0xff]
        %v517 = vld [vmem:[%s302 + $0x2a0] sm:$0xff]
        %v518 = vld [vmem:[%s302 + $0x2e0] sm:$0xff]
        %v519 = vld [vmem:[%s302 + $0x320] sm:$0xff]
        %v520 = vld [vmem:[%s302 + $0x360] sm:$0xff]
        %v521 = vld [vmem:[%s302 + $0x3a0] sm:$0xff]
        %v522 = vld [vmem:[%s302 + $0x3e0] sm:$0xff]
        %v523 = vld [vmem:[#allocation6 + $0x4] sm:$0x1]
        %v525 = vlaneseq
        %v526 = vshrl.u32 %v525, 7
        %v527 = vsub.s32 0, %v526
        %v528 = vrot.slane %v523, %v527
        %v530 = vmul.f32 %v507, %v528
        %v531 = vmul.f32 %v508, %v528
        %v532 = vmul.f32 %v509, %v528
        %v533 = vmul.f32 %v510, %v528
        %v534 = vmul.f32 %v511, %v528
        %v535 = vmul.f32 %v512, %v528
        %v536 = vmul.f32 %v513, %v528
        %v537 = vmul.f32 %v514, %v528
        %v538 = vmul.f32 %v515, %v528
        %v539 = vmul.f32 %v516, %v528
        %v540 = vmul.f32 %v517, %v528
        %v541 = vmul.f32 %v518, %v528
        %v542 = vmul.f32 %v519, %v528
        %v543 = vmul.f32 %v520, %v528
        %v544 = vmul.f32 %v521, %v528
        %v545 = vmul.f32 %v522, %v528
        %v546 = vadd.f32 %v491, %v530
        %v547 = vadd.f32 %v492, %v531
        %v548 = vadd.f32 %v493, %v532
        %v549 = vadd.f32 %v494, %v533
        %v550 = vadd.f32 %v495, %v534
        %v551 = vadd.f32 %v496, %v535
        %v552 = vadd.f32 %v497, %v536
        %v553 = vadd.f32 %v498, %v537
        %v554 = vadd.f32 %v499, %v538
        %v555 = vadd.f32 %v500, %v539
        %v556 = vadd.f32 %v501, %v540
        %v557 = vadd.f32 %v502, %v541
        %v558 = vadd.f32 %v503, %v542
        %v559 = vadd.f32 %v504, %v543
        %v560 = vadd.f32 %v505, %v544
        %v561 = vadd.f32 %v506, %v545
        %v562 = vld [vmem:[%s302 + $0x28] sm:$0xff]
        %v563 = vld [vmem:[%s302 + $0x68] sm:$0xff]
        %v564 = vld [vmem:[%s302 + $0xa8] sm:$0xff]
        %v565 = vld [vmem:[%s302 + $0xe8] sm:$0xff]
        %v566 = vld [vmem:[%s302 + $0x128] sm:$0xff]
        %v567 = vld [vmem:[%s302 + $0x168] sm:$0xff]
        %v568 = vld [vmem:[%s302 + $0x1a8] sm:$0xff]
        %v569 = vld [vmem:[%s302 + $0x1e8] sm:$0xff]
        %v570 = vld [vmem:[%s302 + $0x228] sm:$0xff]
        %v571 = vld [vmem:[%s302 + $0x268] sm:$0xff]
        %v572 = vld [vmem:[%s302 + $0x2a8] sm:$0xff]
        %v573 = vld [vmem:[%s302 + $0x2e8] sm:$0xff]
        %v574 = vld [vmem:[%s302 + $0x328] sm:$0xff]
        %v575 = vld [vmem:[%s302 + $0x368] sm:$0xff]
        %v576 = vld [vmem:[%s302 + $0x3a8] sm:$0xff]
        %v577 = vld [vmem:[%s302 + $0x3e8] sm:$0xff]
        %v578 = vld [vmem:[#allocation6 + $0x5] sm:$0x1]
        %v580 = vlaneseq
        %v581 = vshrl.u32 %v580, 7
        %v582 = vsub.s32 0, %v581
        %v583 = vrot.slane %v578, %v582
        %v585 = vmul.f32 %v562, %v583
        %v586 = vmul.f32 %v563, %v583
        %v587 = vmul.f32 %v564, %v583
        %v588 = vmul.f32 %v565, %v583
        %v589 = vmul.f32 %v566, %v583
        %v590 = vmul.f32 %v567, %v583
        %v591 = vmul.f32 %v568, %v583
        %v592 = vmul.f32 %v569, %v583
        %v593 = vmul.f32 %v570, %v583
        %v594 = vmul.f32 %v571, %v583
        %v595 = vmul.f32 %v572, %v583
        %v596 = vmul.f32 %v573, %v583
        %v597 = vmul.f32 %v574, %v583
        %v598 = vmul.f32 %v575, %v583
        %v599 = vmul.f32 %v576, %v583
        %v600 = vmul.f32 %v577, %v583
        %v601 = vadd.f32 %v546, %v585
        %v602 = vadd.f32 %v547, %v586
        %v603 = vadd.f32 %v548, %v587
        %v604 = vadd.f32 %v549, %v588
        %v605 = vadd.f32 %v550, %v589
        %v606 = vadd.f32 %v551, %v590
        %v607 = vadd.f32 %v552, %v591
        %v608 = vadd.f32 %v553, %v592
        %v609 = vadd.f32 %v554, %v593
        %v610 = vadd.f32 %v555, %v594
        %v611 = vadd.f32 %v556, %v595
        %v612 = vadd.f32 %v557, %v596
        %v613 = vadd.f32 %v558, %v597
        %v614 = vadd.f32 %v559, %v598
        %v615 = vadd.f32 %v560, %v599
        %v616 = vadd.f32 %v561, %v600
        %v617 = vld [vmem:[%s302 + $0x30] sm:$0xff]
        %v618 = vld [vmem:[%s302 + $0x70] sm:$0xff]
        %v619 = vld [vmem:[%s302 + $0xb0] sm:$0xff]
        %v620 = vld [vmem:[%s302 + $0xf0] sm:$0xff]
        %v621 = vld [vmem:[%s302 + $0x130] sm:$0xff]
        %v622 = vld [vmem:[%s302 + $0x170] sm:$0xff]
        %v623 = vld [vmem:[%s302 + $0x1b0] sm:$0xff]
        %v624 = vld [vmem:[%s302 + $0x1f0] sm:$0xff]
        %v625 = vld [vmem:[%s302 + $0x230] sm:$0xff]
        %v626 = vld [vmem:[%s302 + $0x270] sm:$0xff]
        %v627 = vld [vmem:[%s302 + $0x2b0] sm:$0xff]
        %v628 = vld [vmem:[%s302 + $0x2f0] sm:$0xff]
        %v629 = vld [vmem:[%s302 + $0x330] sm:$0xff]
        %v630 = vld [vmem:[%s302 + $0x370] sm:$0xff]
        %v631 = vld [vmem:[%s302 + $0x3b0] sm:$0xff]
        %v632 = vld [vmem:[%s302 + $0x3f0] sm:$0xff]
        %v633 = vld [vmem:[#allocation6 + $0x6] sm:$0x1]
        %v635 = vlaneseq
        %v636 = vshrl.u32 %v635, 7
        %v637 = vsub.s32 0, %v636
        %v638 = vrot.slane %v633, %v637
        %v640 = vmul.f32 %v617, %v638
        %v641 = vmul.f32 %v618, %v638
        %v642 = vmul.f32 %v619, %v638
        %v643 = vmul.f32 %v620, %v638
        %v644 = vmul.f32 %v621, %v638
        %v645 = vmul.f32 %v622, %v638
        %v646 = vmul.f32 %v623, %v638
        %v647 = vmul.f32 %v624, %v638
        %v648 = vmul.f32 %v625, %v638
        %v649 = vmul.f32 %v626, %v638
        %v650 = vmul.f32 %v627, %v638
        %v651 = vmul.f32 %v628, %v638
        %v652 = vmul.f32 %v629, %v638
        %v653 = vmul.f32 %v630, %v638
        %v654 = vmul.f32 %v631, %v638
        %v655 = vmul.f32 %v632, %v638
        %v656 = vadd.f32 %v601, %v640
        %v657 = vadd.f32 %v602, %v641
        %v658 = vadd.f32 %v603, %v642
        %v659 = vadd.f32 %v604, %v643
        %v660 = vadd.f32 %v605, %v644
        %v661 = vadd.f32 %v606, %v645
        %v662 = vadd.f32 %v607, %v646
        %v663 = vadd.f32 %v608, %v647
        %v664 = vadd.f32 %v609, %v648
        %v665 = vadd.f32 %v610, %v649
        %v666 = vadd.f32 %v611, %v650
        %v667 = vadd.f32 %v612, %v651
        %v668 = vadd.f32 %v613, %v652
        %v669 = vadd.f32 %v614, %v653
        %v670 = vadd.f32 %v615, %v654
        %v671 = vadd.f32 %v616, %v655
        %v672 = vld [vmem:[%s302 + $0x38] sm:$0xff]
        %v673 = vld [vmem:[%s302 + $0x78] sm:$0xff]
        %v674 = vld [vmem:[%s302 + $0xb8] sm:$0xff]
        %v675 = vld [vmem:[%s302 + $0xf8] sm:$0xff]
        %v676 = vld [vmem:[%s302 + $0x138] sm:$0xff]
        %v677 = vld [vmem:[%s302 + $0x178] sm:$0xff]
        %v678 = vld [vmem:[%s302 + $0x1b8] sm:$0xff]
        %v679 = vld [vmem:[%s302 + $0x1f8] sm:$0xff]
        %v680 = vld [vmem:[%s302 + $0x238] sm:$0xff]
        %v681 = vld [vmem:[%s302 + $0x278] sm:$0xff]
        %v682 = vld [vmem:[%s302 + $0x2b8] sm:$0xff]
        %v683 = vld [vmem:[%s302 + $0x2f8] sm:$0xff]
        %v684 = vld [vmem:[%s302 + $0x338] sm:$0xff]
        %v685 = vld [vmem:[%s302 + $0x378] sm:$0xff]
        %v686 = vld [vmem:[%s302 + $0x3b8] sm:$0xff]
        %v687 = vld [vmem:[%s302 + $0x3f8] sm:$0xff]
        %v688 = vld [vmem:[#allocation6 + $0x7] sm:$0x1]
        %v690 = vlaneseq
        %v691 = vshrl.u32 %v690, 7
        %v692 = vsub.s32 0, %v691
        %v693 = vrot.slane %v688, %v692
        %v695 = vmul.f32 %v672, %v693
        %v696 = vmul.f32 %v673, %v693
        %v697 = vmul.f32 %v674, %v693
        %v698 = vmul.f32 %v675, %v693
        %v699 = vmul.f32 %v676, %v693
        %v700 = vmul.f32 %v677, %v693
        %v701 = vmul.f32 %v678, %v693
        %v702 = vmul.f32 %v679, %v693
        %v703 = vmul.f32 %v680, %v693
        %v704 = vmul.f32 %v681, %v693
        %v705 = vmul.f32 %v682, %v693
        %v706 = vmul.f32 %v683, %v693
        %v707 = vmul.f32 %v684, %v693
        %v708 = vmul.f32 %v685, %v693
        %v709 = vmul.f32 %v686, %v693
        %v710 = vmul.f32 %v687, %v693
        %v711 = vadd.f32 %v656, %v695
        %v712 = vadd.f32 %v657, %v696
        %v713 = vadd.f32 %v658, %v697
        %v714 = vadd.f32 %v659, %v698
        %v715 = vadd.f32 %v660, %v699
        %v716 = vadd.f32 %v661, %v700
        %v717 = vadd.f32 %v662, %v701
        %v718 = vadd.f32 %v663, %v702
        %v719 = vadd.f32 %v664, %v703
        %v720 = vadd.f32 %v665, %v704
        %v721 = vadd.f32 %v666, %v705
        %v722 = vadd.f32 %v667, %v706
        %v723 = vadd.f32 %v668, %v707
        %v724 = vadd.f32 %v669, %v708
        %v725 = vadd.f32 %v670, %v709
        %v726 = vadd.f32 %v671, %v710
        %v727 = vld [vmem:[#allocation9] sm:$0xff]
        %v728 = vld [vmem:[#allocation9 + $0x8] sm:$0xff]
        %v729 = vld [vmem:[#allocation9 + $0x10] sm:$0xff]
        %v730 = vld [vmem:[#allocation9 + $0x18] sm:$0xff]
        %v731 = vld [vmem:[#allocation9 + $0x20] sm:$0xff]
        %v732 = vld [vmem:[#allocation9 + $0x28] sm:$0xff]
        %v733 = vld [vmem:[#allocation9 + $0x30] sm:$0xff]
        %v734 = vld [vmem:[#allocation9 + $0x38] sm:$0xff]
        %v735 = vld [vmem:[#allocation9 + $0x40] sm:$0xff]
        %v736 = vld [vmem:[#allocation9 + $0x48] sm:$0xff]
        %v737 = vld [vmem:[#allocation9 + $0x50] sm:$0xff]
        %v738 = vld [vmem:[#allocation9 + $0x58] sm:$0xff]
        %v739 = vld [vmem:[#allocation9 + $0x60] sm:$0xff]
        %v740 = vld [vmem:[#allocation9 + $0x68] sm:$0xff]
        %v741 = vld [vmem:[#allocation9 + $0x70] sm:$0xff]
        %v742 = vld [vmem:[#allocation9 + $0x78] sm:$0xff]
        %v743 = vld [vmem:[%s4] sm:$0x1]
        %v745 = vlaneseq
        %v746 = vshrl.u32 %v745, 7
        %v747 = vsub.s32 0, %v746
        %v748 = vrot.slane %v743, %v747
        %750 = vmatprep.subr.mxu0 0.0
        %751 = vmatpush1.msra.mxu0 %v727
        %752 = vmatprep.subr.mxu0 0.0
        %753 = vmatpush1.msra.mxu0 %v728
        %754 = vmatprep.subr.mxu0 0.0
        %755 = vmatpush1.msra.mxu0 %v729
        %756 = vmatprep.subr.mxu0 0.0
        %757 = vmatpush1.msra.mxu0 %v730
        %758 = vmatprep.subr.mxu0 0.0
        %759 = vmatpush1.msra.mxu0 %v731
        %760 = vmatprep.subr.mxu0 0.0
        %761 = vmatpush1.msra.mxu0 %v732
        %762 = vmatprep.subr.mxu0 0.0
        %763 = vmatpush1.msra.mxu0 %v733
        %764 = vmatprep.subr.mxu0 0.0
        %765 = vmatpush1.msra.mxu0 %v734
        %766 = vmatprep.subr.mxu0 0.0
        %767 = vmatpush1.msra.mxu0 %v735
        %768 = vmatprep.subr.mxu0 0.0
        %769 = vmatpush1.msra.mxu0 %v736
        %770 = vmatprep.subr.mxu0 0.0
        %771 = vmatpush1.msra.mxu0 %v737
        %772 = vmatprep.subr.mxu0 0.0
        %773 = vmatpush1.msra.mxu0 %v738
        %774 = vmatprep.subr.mxu0 0.0
        %775 = vmatpush1.msra.mxu0 %v739
        %776 = vmatprep.subr.mxu0 0.0
        %777 = vmatpush1.msra.mxu0 %v740
        %778 = vmatprep.subr.mxu0 0.0
        %779 = vmatpush1.msra.mxu0 %v741
        %780 = vmatprep.subr.mxu0 0.0
        %781 = vmatpush1.msra.mxu0 %v742
        %782 = vmatprep.subr.mxu0 0.0
        %783 = vmatpush1.msra.mxu0 0.0
        %784 = vmatprep.subr.mxu0 0.0
        %785 = vmatpush1.msra.mxu0 0.0
        %786 = vmatprep.subr.mxu0 0.0
        %787 = vmatpush1.msra.mxu0 0.0
        %788 = vmatprep.subr.mxu0 0.0
        %789 = vmatpush1.msra.mxu0 0.0
        %790 = vmatprep.subr.mxu0 0.0
        %791 = vmatpush1.msra.mxu0 0.0
        %792 = vmatprep.subr.mxu0 0.0
        %793 = vmatpush1.msra.mxu0 0.0
        %794 = vmatprep.subr.mxu0 0.0
        %795 = vmatpush1.msra.mxu0 0.0
        %796 = vmatprep.subr.mxu0 0.0
        %797 = vmatpush1.msra.mxu0 0.0
        %798 = vmatprep.subr.mxu0 0.0
        %799 = vmatpush1.msra.mxu0 0.0
        %800 = vmatprep.subr.mxu0 0.0
        %801 = vmatpush1.msra.mxu0 0.0
        %802 = vmatprep.subr.mxu0 0.0
        %803 = vmatpush1.msra.mxu0 0.0
        %804 = vmatprep.subr.mxu0 0.0
        %805 = vmatpush1.msra.mxu0 0.0
        %806 = vmatprep.subr.mxu0 0.0
        %807 = vmatpush1.msra.mxu0 0.0
        %808 = vmatprep.subr.mxu0 0.0
        %809 = vmatpush1.msra.mxu0 0.0
        %810 = vmatprep.subr.mxu0 0.0
        %811 = vmatpush1.msra.mxu0 0.0
        %812 = vmatprep.subr.mxu0 0.0
        %813 = vmatpush1.msra.mxu0 0.0
        %814 = vmatprep.mubr.f32.mxu0 0.0
        %815 = vmatmul.mubr.f32.gmra.mrb[0].mxu0 %v711
        %v816 = vpop.f32.mrb[0].mxu0
        %v817 = vadd.f32 %v748, %v816
        %v818 = vpop.f32.mrb[0].mxu0
        %819 = vmatprep.mubr.f32.mxu0 0.0
        %820 = vmatmul.mubr.f32.gmra.mrb[0].mxu0 %v712
        %v821 = vpop.f32.mrb[0].mxu0
        %v822 = vadd.f32 %v748, %v821
        %v823 = vpop.f32.mrb[0].mxu0
        %824 = vmatprep.mubr.f32.mxu0 0.0
        %825 = vmatmul.mubr.f32.gmra.mrb[0].mxu0 %v713
        %v826 = vpop.f32.mrb[0].mxu0
        %v827 = vadd.f32 %v748, %v826
        %v828 = vpop.f32.mrb[0].mxu0
        %829 = vmatprep.mubr.f32.mxu0 0.0
        %830 = vmatmul.mubr.f32.gmra.mrb[0].mxu0 %v714
        %v831 = vpop.f32.mrb[0].mxu0
        %v832 = vadd.f32 %v748, %v831
        %v833 = vpop.f32.mrb[0].mxu0
        %834 = vmatprep.mubr.f32.mxu0 0.0
        %835 = vmatmul.mubr.f32.gmra.mrb[0].mxu0 %v715
        %v836 = vpop.f32.mrb[0].mxu0
        %v837 = vadd.f32 %v748, %v836
        %v838 = vpop.f32.mrb[0].mxu0
        %839 = vmatprep.mubr.f32.mxu0 0.0
        %840 = vmatmul.mubr.f32.gmra.mrb[0].mxu0 %v716
        %v841 = vpop.f32.mrb[0].mxu0
        %v842 = vadd.f32 %v748, %v841
        %v843 = vpop.f32.mrb[0].mxu0
        %844 = vmatprep.mubr.f32.mxu0 0.0
        %845 = vmatmul.mubr.f32.gmra.mrb[0].mxu0 %v717
        %v846 = vpop.f32.mrb[0].mxu0
        %v847 = vadd.f32 %v748, %v846
        %v848 = vpop.f32.mrb[0].mxu0
        %849 = vmatprep.mubr.f32.mxu0 0.0
        %850 = vmatmul.mubr.f32.gmra.mrb[0].mxu0 %v718
        %v851 = vpop.f32.mrb[0].mxu0
        %v852 = vadd.f32 %v748, %v851
        %v853 = vpop.f32.mrb[0].mxu0
        %854 = vmatprep.mubr.f32.mxu0 0.0
        %855 = vmatmul.mubr.f32.gmra.mrb[0].mxu0 %v719
        %v856 = vpop.f32.mrb[0].mxu0
        %v857 = vadd.f32 %v748, %v856
        %v858 = vpop.f32.mrb[0].mxu0
        %859 = vmatprep.mubr.f32.mxu0 0.0
        %860 = vmatmul.mubr.f32.gmra.mrb[0].mxu0 %v720
        %v861 = vpop.f32.mrb[0].mxu0
        %v862 = vadd.f32 %v748, %v861
        %v863 = vpop.f32.mrb[0].mxu0
        %864 = vmatprep.mubr.f32.mxu0 0.0
        %865 = vmatmul.mubr.f32.gmra.mrb[0].mxu0 %v721
        %v866 = vpop.f32.mrb[0].mxu0
        %v867 = vadd.f32 %v748, %v866
        %v868 = vpop.f32.mrb[0].mxu0
        %869 = vmatprep.mubr.f32.mxu0 0.0
        %870 = vmatmul.mubr.f32.gmra.mrb[0].mxu0 %v722
        %v871 = vpop.f32.mrb[0].mxu0
        %v872 = vadd.f32 %v748, %v871
        %v873 = vpop.f32.mrb[0].mxu0
        %874 = vmatprep.mubr.f32.mxu0 0.0
        %875 = vmatmul.mubr.f32.gmra.mrb[0].mxu0 %v723
        %v876 = vpop.f32.mrb[0].mxu0
        %v877 = vadd.f32 %v748, %v876
        %v878 = vpop.f32.mrb[0].mxu0
        %879 = vmatprep.mubr.f32.mxu0 0.0
        %880 = vmatmul.mubr.f32.gmra.mrb[0].mxu0 %v724
        %v881 = vpop.f32.mrb[0].mxu0
        %v882 = vadd.f32 %v748, %v881
        %v883 = vpop.f32.mrb[0].mxu0
        %884 = vmatprep.mubr.f32.mxu0 0.0
        %885 = vmatmul.mubr.f32.gmra.mrb[0].mxu0 %v725
        %v886 = vpop.f32.mrb[0].mxu0
        %v887 = vadd.f32 %v748, %v886
        %v888 = vpop.f32.mrb[0].mxu0
        %889 = vmatprep.mubr.f32.mxu0 0.0
        %890 = vmatmul.mubr.f32.gmra.mrb[0].mxu0 %v726
        %v891 = vpop.f32.mrb[0].mxu0
        %v892 = vadd.f32 %v748, %v891
        %v893 = vpop.f32.mrb[0].mxu0
        %894 = vdwg.mxu0
        %895 = vst [vmem:[%s198] sm:$0xff] %v817
        %896 = vst [vmem:[%s198 + $0x8] sm:$0xff] %v822
        %897 = vst [vmem:[%s198 + $0x10] sm:$0xff] %v827
        %898 = vst [vmem:[%s198 + $0x18] sm:$0xff] %v832
        %899 = vst [vmem:[%s198 + $0x20] sm:$0xff] %v837
        %900 = vst [vmem:[%s198 + $0x28] sm:$0xff] %v842
        %901 = vst [vmem:[%s198 + $0x30] sm:$0xff] %v847
        %902 = vst [vmem:[%s198 + $0x38] sm:$0xff] %v852
        %903 = vst [vmem:[%s198 + $0x40] sm:$0xff] %v857
        %904 = vst [vmem:[%s198 + $0x48] sm:$0xff] %v862
        %905 = vst [vmem:[%s198 + $0x50] sm:$0xff] %v867
        %906 = vst [vmem:[%s198 + $0x58] sm:$0xff] %v872
        %907 = vst [vmem:[%s198 + $0x60] sm:$0xff] %v877
        %908 = vst [vmem:[%s198 + $0x68] sm:$0xff] %v882
        %909 = vst [vmem:[%s198 + $0x70] sm:$0xff] %v887
        %910 = vst [vmem:[%s198 + $0x78] sm:$0xff] %v892
        %s911 = sand.u32 %s112, 1
        %s912 = scalar_lea.sflag [#allocation8], %s911
        %s913 = sand.u32 %s112, 1
        %s914 = smul.addr %s913, 128
        %s915 = scalar_lea.vmem [#allocation11], %s914
        // Predicated region
        $region70: #{tpu_custom_call.1} parent=31 // pred_check
          %p916 = pneg %p122
        $region71: #{tpu_custom_call.1} parent=31 // pred_check_branch
          %918 = sbr.rel (%p916) target = $region73
        $region72: #{tpu_custom_call.1} parent=31 // pred_region
          %s919 = smul.u32 %s29, 2
          %s920 = sadd.s32 %s919, %s30
          %s921 = smul.u32 16, %s920
          %s923 = ssub.s32 2048, 2048
          %924 = vsyncadd %s912, %s923
          %s925 = smul.addr %s921, 128
          %s926 = scalar_lea.hbm %s5, %s925
          %s927 = sshll.u32 %s915, 4
          %s928 = int_to_ptr.vmem [resolvable:$true] %s927
          %933 = dma.vmem_to_hbm [thread:$0]  %s928, 2048, %s926, %s912, 128, 128, 8
        $region73: #{tpu_custom_call.1} parent=31 // pred_fallthru
          _
      $region32: #{tpu_custom_call.1} parent=5 // pred_fallthru
        _
      %p934 = scmp.le.s32.totalorder 2, %s20
      // Predicated region
      $region74: #{tpu_custom_call.1} parent=5 // pred_check
        %p935 = pneg %p934
      $region75: #{tpu_custom_call.1} parent=5 // pred_check_branch
        %937 = sbr.rel (%p935) target = $region77
      $region76: #{tpu_custom_call.1} parent=5 // pred_region
        %s938 = ssub.s32 %s20, 2
        // Predicated region
        $region78: #{tpu_custom_call.1} parent=76 // pred_check
          %p939 = pneg %p128
        $region79: #{tpu_custom_call.1} parent=76 // pred_check_branch
          %941 = sbr.rel (%p939) target = $region81
        $region80: #{tpu_custom_call.1} parent=76 // pred_region
          %s942 = sand.u32 %s113, 1
          %s943 = scalar_lea.sflag [#allocation8], %s942
          %s944 = sand.u32 %s113, 1
          %s945 = smul.addr %s944, 128
          %s946 = scalar_lea.vmem [#allocation11], %s945
          %947 = dma.done %s943, 2048
        $region81: #{tpu_custom_call.1} parent=76 // pred_fallthru
          _
      $region77: #{tpu_custom_call.1} parent=5 // pred_fallthru
        _
    $region6: #{tpu_custom_call.1} parent=1 // loop_footer
      %s24 = sadd.s32 1, %s20
    $region7: #{tpu_custom_call.1} parent=1 // loop_footer_branch
      %19 = sbr.rel target = $region3
    $region8: #{tpu_custom_call.1} parent=1 // loop_exit
      _
    %948 = vsyncpa [#allocation7], 1
    %s949 = scalar_lea.sflag [#allocation7], 1
    %950 = vsyncpa %s949, 1
    %951 = vsyncpa [#allocation10], 1
    %952 = vsyncpa [#allocation8], 1
    %s953 = scalar_lea.sflag [#allocation8], 1
    %954 = vsyncpa %s953, 1
  %955 = vsyncmov [#allocation3]
  %s956 = vpop.sfrf %955
  %p957 = scmp.eq.s32.totalorder %s956, 0
  %p958 = pneg %p957
  %960 = shalt.err (%p958)
  %s961 = scalar_lea.sflag [#allocation3], 1
  %962 = vsyncmov %s961
  %s963 = vpop.sfrf %962
  %p964 = scmp.eq.s32.totalorder %s963, 0
  %p965 = pneg %p964
  %967 = shalt.err (%p965)

</llo_original>
